<compile_context>
chip_gen: v6e
topology: v6e:2x2x1
jax: 0.10.0
libtpu: 0.0.40
codegen_flags: <defaults>
</compile_context>

<pallas_src>
import jax
import jax.numpy as jnp
from jax.experimental import pallas as pl
from jax.experimental.pallas import tpu as pltpu


def _round_up(x, m):
    return (x + m - 1) // m * m


def _critic_adv_kernel(x_ref, w1_ref, b1_ref, w2_ref, b2_ref, w3_ref, o_ref):
    x = x_ref[...]                                           # (TILE_B, S)
    # Layer 1: Linear(state_dim, mid_dim) + ReLU   (MXU, f32 accumulate)
    h1 = jnp.dot(x, w1_ref[...], preferred_element_type=jnp.float32) + b1_ref[...]
    h1 = jnp.maximum(h1, 0.0)
    # Layer 2: Linear(mid_dim, mid_dim) + Hardswish  (x * relu6(x+3) / 6)
    h2 = jnp.dot(h1, w2_ref[...], preferred_element_type=jnp.float32) + b2_ref[...]
    h2 = h2 * jnp.clip(h2 + 3.0, 0.0, 6.0) * (1.0 / 6.0)
    # Layer 3: Linear(mid_dim, 1) as VPU multiply + lane (XLU) reduction.
    # Avoids an MXU pass whose output width is 1 (1/128..1/256 array usage).
    # w3_ref is the (1, mid_dim) weight row; b3 is added in the wrapper.
    o_ref[...] = jnp.sum(h2 * w3_ref[...], axis=-1, keepdims=True).astype(o_ref.dtype)


def critic_adv_forward(state, w1, b1, w2, b2, w3, b3, *, tile_b=None):
    """state: (B, state_dim) f32.

    w1: (state_dim, mid_dim), b1: (1, mid_dim)
    w2: (mid_dim, mid_dim),   b2: (1, mid_dim)
    w3: (1, mid_dim) weight row of the final Linear, b3: (1, 1) scalar bias.
    Returns (B, 1) f32.
    """
    B, S = state.shape
    mid = w1.shape[1]

    # Tile the batch: sublane-aligned (multiple of 8); cap so VMEM stays small
    # even on v7x's 64 MiB (sweep 512-2048 on v6e for big-B production runs).
    if tile_b is None:
        tile_b = min(512, _round_up(B, 8))
    tile_b = _round_up(tile_b, 8)

    b_pad = _round_up(B, tile_b)
    if b_pad != B:
        state = jnp.pad(state, ((0, b_pad - B), (0, 0)))
    num_tiles = b_pad // tile_b

    out = pl.pallas_call(
        _critic_adv_kernel,
        out_shape=jax.ShapeDtypeStruct((b_pad, 1), jnp.float32),
        grid=(num_tiles,),
        in_specs=[
            pl.BlockSpec((tile_b, S), lambda i: (i, 0)),      # x: streamed per tile
            pl.BlockSpec((S, mid), lambda i: (0, 0)),         # w1: resident
            pl.BlockSpec((1, mid), lambda i: (0, 0)),         # b1: resident
            pl.BlockSpec((mid, mid), lambda i: (0, 0)),       # w2: resident
            pl.BlockSpec((1, mid), lambda i: (0, 0)),         # b2: resident
            pl.BlockSpec((1, mid), lambda i: (0, 0)),         # w3 row: resident
        ],
        out_specs=pl.BlockSpec((tile_b, 1), lambda i: (i, 0)),
        compiler_params=pltpu.CompilerParams(
            dimension_semantics=("parallel",),
        ),
    )(state, w1, b1, w2, b2, w3)

    # Final scalar bias added outside the kernel (one fewer padded VMEM block).
    return out[:B] + b3


def init_params(key, state_dim, mid_dim):
    """Mirror the PyTorch module's init.

    Layers 1 & 2: default torch Linear init (uniform +-1/sqrt(fan_in)).
    Last layer: orthogonal init scaled by 0.5, bias = 1e-6 (layer_norm(..., std=0.5)).
    Weights of layers 1/2 are stored transposed: (in_features, out_features).
    w3 is stored as a (1, mid_dim) row.
    """
    k1, k2, k3, k4, k5 = jax.random.split(key, 5)

    bound1 = 1.0 / jnp.sqrt(state_dim)
    w1 = jax.random.uniform(k1, (state_dim, mid_dim), jnp.float32, -bound1, bound1)
    b1 = jax.random.uniform(k2, (1, mid_dim), jnp.float32, -bound1, bound1)

    bound2 = 1.0 / jnp.sqrt(mid_dim)
    w2 = jax.random.uniform(k3, (mid_dim, mid_dim), jnp.float32, -bound2, bound2)
    b2 = jax.random.uniform(k4, (1, mid_dim), jnp.float32, -bound2, bound2)

    # Orthogonal (std=0.5) for the (1, mid_dim) last layer: unit row * 0.5.
    a = jax.random.normal(k5, (mid_dim, 1), jnp.float32)
    q, r = jnp.linalg.qr(a)                      # (mid_dim, 1) orthonormal column
    q = q * jnp.sign(jnp.diag(r))                # sign fix like torch orthogonal_
    w3 = (0.5 * q).reshape(1, mid_dim)           # row form
    b3 = jnp.full((1, 1), 1e-6, jnp.float32)

    return w1, b1, w2, b2, w3, b3


def reference_forward(state, w1, b1, w2, b2, w3, b3):
    h1 = jnp.maximum(state @ w1 + b1, 0.0)
    h2 = h1 @ w2 + b2
    h2 = h2 * jnp.clip(h2 + 3.0, 0.0, 6.0) / 6.0
    return h2 @ w3.T + b3


if __name__ == "__main__":
    state_dim, mid_dim = 16, 32
    key = jax.random.PRNGKey(0)
    k_params, k_s1, k_s2 = jax.random.split(key, 3)
    params = init_params(k_params, state_dim, mid_dim)

    # Case 1: small batch, single tile, no padding.
    state = jax.random.normal(k_s1, (8, state_dim), jnp.float32)
    out = jax.block_until_ready(critic_adv_forward(state, *params))
    ref = reference_forward(state, *params)
    assert out.shape == (8, 1), out.shape
    assert jnp.allclose(out, ref, atol=1e-5, rtol=1e-5)

    # Case 2: batch not a multiple of the tile -> exercises padding + multi-tile
    # parallel grid (3 tiles of 16 rows).
    state2 = jax.random.normal(k_s2, (37, state_dim), jnp.float32)
    out2 = jax.block_until_ready(critic_adv_forward(state2, *params, tile_b=16))
    ref2 = reference_forward(state2, *params)
    assert out2.shape == (37, 1), out2.shape
    assert jnp.allclose(out2, ref2, atol=1e-5, rtol=1e-5)

    print("KERNEL_OK")
</pallas_src>

<mosaic_0001>
module attributes {stable_mosaic.version = 11 : i64} {
  func.func @_critic_adv_kernel(%arg0: i32, %arg1: memref<8x16xf32, #tpu.memory_space<vmem>>, %arg2: memref<16x32xf32, #tpu.memory_space<vmem>>, %arg3: memref<1x32xf32, #tpu.memory_space<vmem>>, %arg4: memref<32x32xf32, #tpu.memory_space<vmem>>, %arg5: memref<1x32xf32, #tpu.memory_space<vmem>>, %arg6: memref<1x32xf32, #tpu.memory_space<vmem>>, %arg7: memref<8x1xf32, #tpu.memory_space<vmem>>) attributes {dimension_semantics = [#tpu.dimension_semantics<parallel>], iteration_bounds = array<i64: 1>, scalar_prefetch = 0 : i64, scratch_operands = 0 : i64, tpu.core_type = #tpu.core_type<tc>, window_params = [{transform_indices = @transform_0, window_bounds = array<i64: 8, 16>}, {pipeline_mode = #tpu.pipeline_mode<synchronous>, transform_indices = @transform_1, window_bounds = array<i64: 16, 32>}, {pipeline_mode = #tpu.pipeline_mode<synchronous>, transform_indices = @transform_2, window_bounds = array<i64: 1, 32>}, {pipeline_mode = #tpu.pipeline_mode<synchronous>, transform_indices = @transform_3, window_bounds = array<i64: 32, 32>}, {pipeline_mode = #tpu.pipeline_mode<synchronous>, transform_indices = @transform_4, window_bounds = array<i64: 1, 32>}, {pipeline_mode = #tpu.pipeline_mode<synchronous>, transform_indices = @transform_5, window_bounds = array<i64: 1, 32>}, {transform_indices = @transform_6, window_bounds = array<i64: 8, 1>}]} {
    %c0 = arith.constant 0 : index
    %c0_0 = arith.constant 0 : index
    %0 = vector.load %arg1[%c0, %c0_0] : memref<8x16xf32, #tpu.memory_space<vmem>>, vector<8x16xf32>
    %c0_1 = arith.constant 0 : index
    %c0_2 = arith.constant 0 : index
    %1 = vector.load %arg2[%c0_1, %c0_2] : memref<16x32xf32, #tpu.memory_space<vmem>>, vector<16x32xf32>
    %cst = arith.constant dense<0.000000e+00> : vector<8x32xf32>
    %2 = tpu.matmul %0, %1, %cst {dimension_numbers = #tpu.dot_dimension_numbers<[1], [0], [0], [1], [0, 0, 1, 1], [], []>} : vector<8x16xf32>, vector<16x32xf32>, vector<8x32xf32> -> vector<8x32xf32>
    %c0_3 = arith.constant 0 : index
    %c0_4 = arith.constant 0 : index
    %3 = vector.load %arg3[%c0_3, %c0_4] : memref<1x32xf32, #tpu.memory_space<vmem>>, vector<1x32xf32>
    %4 = vector.broadcast %3 : vector<1x32xf32> to vector<8x32xf32>
    %5 = arith.addf %2, %4 : vector<8x32xf32>
    %cst_5 = arith.constant 0.000000e+00 : f32
    %6 = vector.broadcast %cst_5 : f32 to vector<8x32xf32>
    %7 = arith.maximumf %5, %6 : vector<8x32xf32>
    %c0_6 = arith.constant 0 : index
    %c0_7 = arith.constant 0 : index
    %8 = vector.load %arg4[%c0_6, %c0_7] : memref<32x32xf32, #tpu.memory_space<vmem>>, vector<32x32xf32>
    %cst_8 = arith.constant dense<0.000000e+00> : vector<8x32xf32>
    %9 = tpu.matmul %7, %8, %cst_8 {dimension_numbers = #tpu.dot_dimension_numbers<[1], [0], [0], [1], [0, 0, 1, 1], [], []>} : vector<8x32xf32>, vector<32x32xf32>, vector<8x32xf32> -> vector<8x32xf32>
    %c0_9 = arith.constant 0 : index
    %c0_10 = arith.constant 0 : index
    %10 = vector.load %arg5[%c0_9, %c0_10] : memref<1x32xf32, #tpu.memory_space<vmem>>, vector<1x32xf32>
    %11 = vector.broadcast %10 : vector<1x32xf32> to vector<8x32xf32>
    %12 = arith.addf %9, %11 : vector<8x32xf32>
    %cst_11 = arith.constant 3.000000e+00 : f32
    %13 = vector.broadcast %cst_11 : f32 to vector<8x32xf32>
    %14 = arith.addf %12, %13 : vector<8x32xf32>
    %cst_12 = arith.constant 0.000000e+00 : f32
    %cst_13 = arith.constant 6.000000e+00 : f32
    %15 = vector.broadcast %cst_12 : f32 to vector<8x32xf32>
    %16 = arith.maximumf %15, %14 : vector<8x32xf32>
    %17 = vector.broadcast %cst_13 : f32 to vector<8x32xf32>
    %18 = arith.minimumf %17, %16 : vector<8x32xf32>
    %19 = arith.mulf %12, %18 : vector<8x32xf32>
    %cst_14 = arith.constant 0.166666672 : f32
    %20 = vector.broadcast %cst_14 : f32 to vector<8x32xf32>
    %21 = arith.mulf %19, %20 : vector<8x32xf32>
    %c0_15 = arith.constant 0 : index
    %c0_16 = arith.constant 0 : index
    %22 = vector.load %arg6[%c0_15, %c0_16] : memref<1x32xf32, #tpu.memory_space<vmem>>, vector<1x32xf32>
    %23 = vector.broadcast %22 : vector<1x32xf32> to vector<8x32xf32>
    %24 = arith.mulf %21, %23 : vector<8x32xf32>
    %cst_17 = arith.constant dense<0.000000e+00> : vector<8xf32>
    %25 = vector.multi_reduction <add>, %24, %cst_17 [1] : vector<8x32xf32> to vector<8xf32>
    %26 = vector.shape_cast %25 : vector<8xf32> to vector<8x1xf32>
    %c0_18 = arith.constant 0 : index
    %c0_19 = arith.constant 0 : index
    %27 = vector.load %arg7[%c0_18, %c0_19] : memref<8x1xf32, #tpu.memory_space<vmem>>, vector<8x1xf32>
    tpu.vector_store %arg7[%c0_18, %c0_19], %26 {strides = array<i32>} : memref<8x1xf32, #tpu.memory_space<vmem>>, vector<8x1xf32>,
    return
  }
  func.func @transform_0(%arg0: i32) -> (i32, i32) {
    %c0_i32 = arith.constant 0 : i32
    %c0_i32_0 = arith.constant 0 : i32
    return %arg0, %c0_i32 : i32, i32
  }
  func.func @transform_1(%arg0: i32) -> (i32, i32) {
    %c0_i32 = arith.constant 0 : i32
    %c0_i32_0 = arith.constant 0 : i32
    %c0_i32_1 = arith.constant 0 : i32
    return %c0_i32, %c0_i32_0 : i32, i32
  }
  func.func @transform_2(%arg0: i32) -> (i32, i32) {
    %c0_i32 = arith.constant 0 : i32
    %c0_i32_0 = arith.constant 0 : i32
    %c0_i32_1 = arith.constant 0 : i32
    return %c0_i32, %c0_i32_0 : i32, i32
  }
  func.func @transform_3(%arg0: i32) -> (i32, i32) {
    %c0_i32 = arith.constant 0 : i32
    %c0_i32_0 = arith.constant 0 : i32
    %c0_i32_1 = arith.constant 0 : i32
    return %c0_i32, %c0_i32_0 : i32, i32
  }
  func.func @transform_4(%arg0: i32) -> (i32, i32) {
    %c0_i32 = arith.constant 0 : i32
    %c0_i32_0 = arith.constant 0 : i32
    %c0_i32_1 = arith.constant 0 : i32
    return %c0_i32, %c0_i32_0 : i32, i32
  }
  func.func @transform_5(%arg0: i32) -> (i32, i32) {
    %c0_i32 = arith.constant 0 : i32
    %c0_i32_0 = arith.constant 0 : i32
    %c0_i32_1 = arith.constant 0 : i32
    return %c0_i32, %c0_i32_0 : i32, i32
  }
  func.func @transform_6(%arg0: i32) -> (i32, i32) {
    %c0_i32 = arith.constant 0 : i32
    %c0_i32_0 = arith.constant 0 : i32
    return %arg0, %c0_i32 : i32, i32
  }
}

</mosaic_0001>

<llo_original>
// kernel: tpu_custom_call.1
$region0: #{tpu_custom_call.1}
  #allocation0 [shape = 'u32[]', space=smem, size = 0x4, offset = 0x4, fixed_abs, tag = 'smem constant byte address 0x4 - core index']
  #allocation1 [shape = 'u32[144,128]{1,0:T(1,128)}', space=vmem, size = 0x12000, scoped, tag = 'internal scratch']
  %s0 = inlined_call_operand.hbm [shape: f32[8,16], index: 0, kind: input, shape index: {}]
  %s1 = inlined_call_operand.hbm [shape: f32[16,32], index: 1, kind: input, shape index: {}]
  %s2 = inlined_call_operand.vmem [shape: f32[1,32], index: 2, kind: input, shape index: {}]
  %s3 = inlined_call_operand.hbm [shape: f32[32,32], index: 3, kind: input, shape index: {}]
  %s4 = inlined_call_operand.vmem [shape: f32[1,32], index: 4, kind: input, shape index: {}]
  %s5 = inlined_call_operand.vmem [shape: f32[1,32], index: 5, kind: input, shape index: {}]
  %s6 = inlined_call_operand.vmem [shape: f32[8,1], index: 6, kind: output, shape index: {}]
  %s7 = sld [smem:[#allocation0]]
  $region46: #{tpu_custom_call.1} parent=0
    _
  %s9 = ssub.s32 1, %s7
  %s10 = scalar_select 0, %s9, %s7
  $region1: #{tpu_custom_call.1} parent=0
    #allocation2 [shape = 'u8[4096]{0}', space=vmem, size = 0x1000, scoped, tag = 'input window, operand 0, single buffered']
    #allocation3 [shape = 's32[1]{0}', space=sflag, size = 0x4, scoped, tag = 'scoped memory for tpu_custom_call.1']
    #allocation4 [shape = 'u8[8192]{0}', space=vmem, size = 0x2000, scoped, tag = 'input window, operand 1, single buffered']
    #allocation5 [shape = 's32[1]{0}', space=sflag, size = 0x4, scoped, tag = 'scoped memory for tpu_custom_call.1']
    #allocation6 [shape = 'u8[16384]{0}', space=vmem, size = 0x4000, scoped, tag = 'input window, operand 3, single buffered']
    %11 = vsyncpa [#allocation3], 0
    %12 = vsyncpa [#allocation5], 0
    // Predicated region
    $region2: #{tpu_custom_call.1} parent=1 // pred_check
      _
    $region3: #{tpu_custom_call.1} parent=1 // pred_check_branch
      %14 = sbr.rel (0) target = $region5
    $region4: #{tpu_custom_call.1} parent=1 // pred_region
      %s16 = ssub.s32 128, 128
      %17 = vsyncadd [#allocation3], %s16
      %s19 = sshll.u32 [#allocation2], 4
      %s20 = int_to_ptr.vmem [resolvable:$true] %s19
      %22 = dma.hbm_to_vmem [thread:$0]  %s0, 128, %s20, [#allocation3]
    $region5: #{tpu_custom_call.1} parent=1 // pred_fallthru
      _
    // Predicated region
    $region6: #{tpu_custom_call.1} parent=1 // pred_check
      _
    $region7: #{tpu_custom_call.1} parent=1 // pred_check_branch
      %24 = sbr.rel (0) target = $region9
    $region8: #{tpu_custom_call.1} parent=1 // pred_region
      %s26 = ssub.s32 256, 256
      %27 = vsyncadd [#allocation5], %s26
      %s28 = sshll.u32 [#allocation4], 4
      %s29 = int_to_ptr.vmem [resolvable:$true] %s28
      %34 = dma.hbm_to_vmem [thread:$0]  %s1, 256, %s29, [#allocation5], 128, 128, 8
    $region9: #{tpu_custom_call.1} parent=1 // pred_fallthru
      _
    // Predicated region
    $region10: #{tpu_custom_call.1} parent=1 // pred_check
      _
    $region11: #{tpu_custom_call.1} parent=1 // pred_check_branch
      %36 = sbr.rel (0) target = $region13
    $region12: #{tpu_custom_call.1} parent=1 // pred_region
      _
    $region13: #{tpu_custom_call.1} parent=1 // pred_fallthru
      _
    // Predicated region
    $region14: #{tpu_custom_call.1} parent=1 // pred_check
      _
    $region15: #{tpu_custom_call.1} parent=1 // pred_check_branch
      %38 = sbr.rel (0) target = $region17
    $region16: #{tpu_custom_call.1} parent=1 // pred_region
      %s40 = ssub.s32 512, 512
      %41 = vsyncadd [#allocation5], %s40
      %s42 = sshll.u32 [#allocation6], 4
      %s43 = int_to_ptr.vmem [resolvable:$true] %s42
      %48 = dma.hbm_to_vmem [thread:$0]  %s3, 512, %s43, [#allocation5], 128, 128, 8
    $region17: #{tpu_custom_call.1} parent=1 // pred_fallthru
      _
    // Predicated region
    $region18: #{tpu_custom_call.1} parent=1 // pred_check
      _
    $region19: #{tpu_custom_call.1} parent=1 // pred_check_branch
      %50 = sbr.rel (0) target = $region21
    $region20: #{tpu_custom_call.1} parent=1 // pred_region
      _
    $region21: #{tpu_custom_call.1} parent=1 // pred_fallthru
      _
    // Predicated region
    $region22: #{tpu_custom_call.1} parent=1 // pred_check
      _
    $region23: #{tpu_custom_call.1} parent=1 // pred_check_branch
      %52 = sbr.rel (0) target = $region25
    $region24: #{tpu_custom_call.1} parent=1 // pred_region
      _
    $region25: #{tpu_custom_call.1} parent=1 // pred_fallthru
      _
    // Predicated region
    $region26: #{tpu_custom_call.1} parent=1 // pred_check
      _
    $region27: #{tpu_custom_call.1} parent=1 // pred_check_branch
      %54 = sbr.rel (0) target = $region29
    $region28: #{tpu_custom_call.1} parent=1 // pred_region
      %55 = dma.done [#allocation3], 128
    $region29: #{tpu_custom_call.1} parent=1 // pred_fallthru
      _
    // Predicated region
    $region30: #{tpu_custom_call.1} parent=1 // pred_check
      _
    $region31: #{tpu_custom_call.1} parent=1 // pred_check_branch
      %57 = sbr.rel (0) target = $region33
    $region32: #{tpu_custom_call.1} parent=1 // pred_region
      %58 = dma.done [#allocation5], 256
    $region33: #{tpu_custom_call.1} parent=1 // pred_fallthru
      _
    // Predicated region
    $region34: #{tpu_custom_call.1} parent=1 // pred_check
      _
    $region35: #{tpu_custom_call.1} parent=1 // pred_check_branch
      %60 = sbr.rel (0) target = $region37
    $region36: #{tpu_custom_call.1} parent=1 // pred_region
      %61 = dma.done [#allocation5], 512
    $region37: #{tpu_custom_call.1} parent=1 // pred_fallthru
      _
    %v62 = vld [vmem:[#allocation2] sm:$0xff]
    %v63 = vld [vmem:[#allocation4] sm:$0xff]
    %v64 = vld [vmem:[#allocation4 + $0x8] sm:$0xff]
    %v65 = vld [vmem:[%s2] sm:$0x1]
    %v67 = vlaneseq
    %v68 = vshrl.u32 %v67, 7
    %v69 = vsub.s32 0, %v68
    %v70 = vrot.slane %v65, %v69
    %vm72 = vcmask 130048
    %v74 = vsel %vm72, %v62, 0
    %76 = vmatprep.subr.mxu0 0.0
    %77 = vmatpush1.msra.mxu0 0.0
    %78 = vmatprep.subr.mxu0 0.0
    %79 = vmatpush1.msra.mxu0 0.0
    %80 = vmatprep.subr.mxu0 0.0
    %81 = vmatpush1.msra.mxu0 0.0
    %82 = vmatprep.subr.mxu0 0.0
    %83 = vmatpush1.msra.mxu0 0.0
    %84 = vmatprep.subr.mxu0 0.0
    %85 = vmatpush1.msra.mxu0 0.0
    %86 = vmatprep.subr.mxu0 0.0
    %87 = vmatpush1.msra.mxu0 0.0
    %88 = vmatprep.subr.mxu0 0.0
    %89 = vmatpush1.msra.mxu0 0.0
    %90 = vmatprep.subr.mxu0 0.0
    %91 = vmatpush1.msra.mxu0 0.0
    %92 = vmatprep.subr.mxu0 0.0
    %93 = vmatpush1.msra.mxu0 0.0
    %94 = vmatprep.subr.mxu0 0.0
    %95 = vmatpush1.msra.mxu0 0.0
    %96 = vmatprep.subr.mxu0 0.0
    %97 = vmatpush1.msra.mxu0 0.0
    %98 = vmatprep.subr.mxu0 0.0
    %99 = vmatpush1.msra.mxu0 0.0
    %100 = vmatprep.subr.mxu0 0.0
    %101 = vmatpush1.msra.mxu0 0.0
    %102 = vmatprep.subr.mxu0 0.0
    %103 = vmatpush1.msra.mxu0 0.0
    %104 = vmatprep.subr.mxu0 0.0
    %105 = vmatpush1.msra.mxu0 %v64
    %106 = vmatprep.subr.mxu0 0.0
    %107 = vmatpush1.msra.mxu0 %v63
    %108 = vmatprep.subr.mxu0 0.0
    %109 = vmatpush2.msra.mxu0 0.0
    %110 = vmatprep.subr.mxu0 0.0
    %111 = vmatpush2.msra.mxu0 0.0
    %112 = vmatprep.subr.mxu0 0.0
    %113 = vmatpush2.msra.mxu0 0.0
    %114 = vmatprep.subr.mxu0 0.0
    %115 = vmatpush2.msra.mxu0 0.0
    %116 = vmatprep.subr.mxu0 0.0
    %117 = vmatpush2.msra.mxu0 0.0
    %118 = vmatprep.subr.mxu0 0.0
    %119 = vmatpush2.msra.mxu0 0.0
    %120 = vmatprep.subr.mxu0 0.0
    %121 = vmatpush2.msra.mxu0 0.0
    %122 = vmatprep.subr.mxu0 0.0
    %123 = vmatpush2.msra.mxu0 0.0
    %124 = vmatprep.subr.mxu0 0.0
    %125 = vmatpush2.msra.mxu0 0.0
    %126 = vmatprep.subr.mxu0 0.0
    %127 = vmatpush2.msra.mxu0 0.0
    %128 = vmatprep.subr.mxu0 0.0
    %129 = vmatpush2.msra.mxu0 0.0
    %130 = vmatprep.subr.mxu0 0.0
    %131 = vmatpush2.msra.mxu0 0.0
    %132 = vmatprep.subr.mxu0 0.0
    %133 = vmatpush2.msra.mxu0 0.0
    %134 = vmatprep.subr.mxu0 0.0
    %135 = vmatpush2.msra.mxu0 0.0
    %136 = vmatprep.subr.mxu0 0.0
    %137 = vmatpush2.msra.mxu0 0.0
    %138 = vmatprep.subr.mxu0 0.0
    %139 = vmatpush2.msra.mxu0 0.0
    %140 = vmatprep.mubr.f32.mxu0 0.0
    %141 = vmatmul.mubr.f32.gmra.mxu0 %v74
    %v142 = vpop.f32.mrf.mxu0
    %v143 = vadd.f32 %v70, %v142
    %v144 = vpop.f32.mrf.mxu0
    %145 = vdwg.mxu0
    %v146 = vmax.f32 %v143, 0.0
    %v147 = vld [vmem:[#allocation6] sm:$0xff]
    %v148 = vld [vmem:[#allocation6 + $0x8] sm:$0xff]
    %v149 = vld [vmem:[#allocation6 + $0x10] sm:$0xff]
    %v150 = vld [vmem:[#allocation6 + $0x18] sm:$0xff]
    %v151 = vld [vmem:[%s4] sm:$0x1]
    %v153 = vlaneseq
    %v154 = vshrl.u32 %v153, 7
    %v155 = vsub.s32 0, %v154
    %v156 = vrot.slane %v151, %v155
    %vm158 = vcmask 261120
    %v160 = vsel %vm158, %v146, 0
    %162 = vmatprep.subr.mxu0 0.0
    %163 = vmatpush1.msra.mxu0 0.0
    %164 = vmatprep.subr.mxu0 0.0
    %165 = vmatpush1.msra.mxu0 0.0
    %166 = vmatprep.subr.mxu0 0.0
    %167 = vmatpush1.msra.mxu0 0.0
    %168 = vmatprep.subr.mxu0 0.0
    %169 = vmatpush1.msra.mxu0 0.0
    %170 = vmatprep.subr.mxu0 0.0
    %171 = vmatpush1.msra.mxu0 0.0
    %172 = vmatprep.subr.mxu0 0.0
    %173 = vmatpush1.msra.mxu0 0.0
    %174 = vmatprep.subr.mxu0 0.0
    %175 = vmatpush1.msra.mxu0 0.0
    %176 = vmatprep.subr.mxu0 0.0
    %177 = vmatpush1.msra.mxu0 0.0
    %178 = vmatprep.subr.mxu0 0.0
    %179 = vmatpush1.msra.mxu0 0.0
    %180 = vmatprep.subr.mxu0 0.0
    %181 = vmatpush1.msra.mxu0 0.0
    %182 = vmatprep.subr.mxu0 0.0
    %183 = vmatpush1.msra.mxu0 0.0
    %184 = vmatprep.subr.mxu0 0.0
    %185 = vmatpush1.msra.mxu0 0.0
    %186 = vmatprep.subr.mxu0 0.0
    %187 = vmatpush1.msra.mxu0 %v150
    %188 = vmatprep.subr.mxu0 0.0
    %189 = vmatpush1.msra.mxu0 %v149
    %190 = vmatprep.subr.mxu0 0.0
    %191 = vmatpush1.msra.mxu0 %v148
    %192 = vmatprep.subr.mxu0 0.0
    %193 = vmatpush1.msra.mxu0 %v147
    %194 = vmatprep.subr.mxu0 0.0
    %195 = vmatpush2.msra.mxu0 0.0
    %196 = vmatprep.subr.mxu0 0.0
    %197 = vmatpush2.msra.mxu0 0.0
    %198 = vmatprep.subr.mxu0 0.0
    %199 = vmatpush2.msra.mxu0 0.0
    %200 = vmatprep.subr.mxu0 0.0
    %201 = vmatpush2.msra.mxu0 0.0
    %202 = vmatprep.subr.mxu0 0.0
    %203 = vmatpush2.msra.mxu0 0.0
    %204 = vmatprep.subr.mxu0 0.0
    %205 = vmatpush2.msra.mxu0 0.0
    %206 = vmatprep.subr.mxu0 0.0
    %207 = vmatpush2.msra.mxu0 0.0
    %208 = vmatprep.subr.mxu0 0.0
    %209 = vmatpush2.msra.mxu0 0.0
    %210 = vmatprep.subr.mxu0 0.0
    %211 = vmatpush2.msra.mxu0 0.0
    %212 = vmatprep.subr.mxu0 0.0
    %213 = vmatpush2.msra.mxu0 0.0
    %214 = vmatprep.subr.mxu0 0.0
    %215 = vmatpush2.msra.mxu0 0.0
    %216 = vmatprep.subr.mxu0 0.0
    %217 = vmatpush2.msra.mxu0 0.0
    %218 = vmatprep.subr.mxu0 0.0
    %219 = vmatpush2.msra.mxu0 0.0
    %220 = vmatprep.subr.mxu0 0.0
    %221 = vmatpush2.msra.mxu0 0.0
    %222 = vmatprep.subr.mxu0 0.0
    %223 = vmatpush2.msra.mxu0 0.0
    %224 = vmatprep.subr.mxu0 0.0
    %225 = vmatpush2.msra.mxu0 0.0
    %226 = vmatprep.mubr.f32.mxu0 0.0
    %227 = vmatmul.mubr.f32.gmra.mxu0 %v160
    %v228 = vpop.f32.mrf.mxu0
    %v229 = vadd.f32 %v156, %v228
    %v230 = vpop.f32.mrf.mxu0
    %231 = vdwg.mxu0
    %v232 = vadd.f32 %v229, 3.0
    %v233 = vmax.f32 %v232, 0.0
    %v234 = vmin.f32 %v233, 6.0
    %v235 = vmul.f32 %v229, %v234
    %v236 = vmul.f32 %v235, 0.16666667
    %v237 = vld [vmem:[%s5] sm:$0x1]
    %v239 = vlaneseq
    %v240 = vshrl.u32 %v239, 7
    %v241 = vsub.s32 0, %v240
    %v242 = vrot.slane %v237, %v241
    %v244 = vmul.f32 %v236, %v242
    %v245 = vsel %vm158, %v244, 0.0
    %246 = vadd.xlane.f32.xlu0 %v245
    %v247 = vpop.xlane.xlu0 %246
    %vm248 = vcmask 7168
    %249 = vst.msk [vmem:[%s6] sm:$0xff] %vm248, %v247
    // Predicated region
    $region38: #{tpu_custom_call.1} parent=1 // pred_check
      _
    $region39: #{tpu_custom_call.1} parent=1 // pred_check_branch
      %251 = sbr.rel (0) target = $region41
    $region40: #{tpu_custom_call.1} parent=1 // pred_region
      _
    $region41: #{tpu_custom_call.1} parent=1 // pred_fallthru
      _
    // Predicated region
    $region42: #{tpu_custom_call.1} parent=1 // pred_check
      _
    $region43: #{tpu_custom_call.1} parent=1 // pred_check_branch
      %253 = sbr.rel (0) target = $region45
    $region44: #{tpu_custom_call.1} parent=1 // pred_region
      _
    $region45: #{tpu_custom_call.1} parent=1 // pred_fallthru
      _
    %254 = vsyncpa [#allocation3], 1
    %255 = vsyncpa [#allocation5], 1

</llo_original>
